<compile_context>
chip_gen: v7x
topology: tpu7x:2x2x1
jax: 0.10.0
libtpu: 0.0.40
codegen_flags: <defaults>
</compile_context>

<pallas_src>
from functools import partial

import jax
import jax.numpy as jnp
import numpy as np
from jax import lax
from jax.experimental import pallas as pl
from jax.experimental.pallas import tpu as pltpu

_LANES = 128
_SUBLANES = 8
# Leading "parallel" grid axis: shards the reduction across the 2 TensorCores
# of dual-TC chips (v7x / v5p). On 1-TC chips it simply runs sequentially.
_NUM_CORE_SPLITS = 2


def _to_rows128(x):
    """Flatten to a (rows, 128) lane-dense slab.

    Free (layout-preserving reshape) when x.size % 128 == 0; otherwise the tail
    is zero-padded (zeros are harmless: weight==0 elements never contribute).
    """
    flat = jnp.ravel(x)
    rem = flat.shape[0] % _LANES
    if rem:
        # TODO(synk): this pad is a full HBM copy for non-lane-aligned inputs;
        # could be avoided by feeding the unpadded array and lane-masking the
        # final partial row inside the kernel.
        flat = jnp.pad(flat, (0, _LANES - rem))
    return flat.reshape(-1, _LANES)


def _head_geometry(rows, tile_rows):
    """(block_rows, tiles, acc_rows, need_mask, last_tile_valid_rows)."""
    br = tile_rows if rows > tile_rows else rows
    tiles = pl.cdiv(rows, br)
    acc_rows = _SUBLANES if br % _SUBLANES == 0 else br
    need_mask = (rows % br) != 0
    rem = rows - (tiles - 1) * br
    return br, tiles, acc_rows, need_mask, rem


def _make_fused_kernel(head0, head1, t0c, t1c, nstats):
    """Fused two-head reduction kernel over a (core, step) grid.

    head* = (block_rows, tiles, acc_rows, need_mask, rem). On core c, step
    i < t0c processes head-0 tile c*t0c + i; step i >= t0c processes head-1
    tile c*t1c + (i - t0c). Out-of-range steps are skipped.
    """
    br0, tiles0, acc0_rows, need_mask0, rem0 = head0
    br1, tiles1, acc1_rows, need_mask1, rem1 = head1

    def compute_planes(p_ref, t_ref, w_ref, row_mask):
        # Upcast in-kernel (keeps HBM traffic at the caller's input dtype).
        p = p_ref[...].astype(jnp.float32)
        t = t_ref[...].astype(jnp.float32)
        w = w_ref[...].astype(jnp.float32)
        d = p - t
        if row_mask is not None:
            # Rows past the array end hold unspecified data -> zero BOTH d and
            # w before forming scale (guards against 0*inf = NaN).
            d = jnp.where(row_mask, d, 0.0)
            w = jnp.where(row_mask, w, 0.0)
        scale = w * d * d
        pos = w > 0.0
        planes = [jnp.where(pos, scale, 0.0), pos.astype(jnp.float32)]
        if nstats == 3:
            planes.append((scale != 0.0).astype(jnp.float32))
        return planes

    def accumulate(p_ref, t_ref, w_ref, out_ref, acc_rows, row_mask):
        planes = compute_planes(p_ref, t_ref, w_ref, row_mask)
        for k, plane in enumerate(planes):
            br = plane.shape[0]
            if br != acc_rows:
                # Fold the (br,128) block to an (acc_rows,128) vreg partial
                # (layout-preserving reshape + VALU adds, no XLU).
                plane = plane.reshape(br // acc_rows, acc_rows, _LANES).sum(axis=0)
            out_ref[0, k] += plane

    def run_head(p_ref, t_ref, w_ref, out_ref, acc_rows, valid, g,
                 br, tiles, need_mask, rem):
        if need_mask:
            is_last = g == (tiles - 1)

            @pl.when(jnp.logical_and(valid, jnp.logical_not(is_last)))
            def _full():
                accumulate(p_ref, t_ref, w_ref, out_ref, acc_rows, None)

            @pl.when(jnp.logical_and(valid, is_last))
            def _ragged():
                row = lax.broadcasted_iota(jnp.int32, (br, _LANES), 0)
                accumulate(p_ref, t_ref, w_ref, out_ref, acc_rows, row < rem)
        else:
            @pl.when(valid)
            def _full():
                accumulate(p_ref, t_ref, w_ref, out_ref, acc_rows, None)

    def kernel(p0_ref, t0_ref, w0_ref, p1_ref, t1_ref, w1_ref,
               out0_ref, out1_ref):
        c = pl.program_id(0)
        i = pl.program_id(1)

        @pl.when(i == 0)
        def _init():
            out0_ref[...] = jnp.zeros_like(out0_ref)
            out1_ref[...] = jnp.zeros_like(out1_ref)

        g0 = c * t0c + i
        valid0 = jnp.logical_and(i < t0c, g0 < tiles0)
        run_head(p0_ref, t0_ref, w0_ref, out0_ref, acc0_rows,
                 valid0, g0, br0, tiles0, need_mask0, rem0)

        g1 = c * t1c + (i - t0c)
        valid1 = jnp.logical_and(i >= t0c, g1 < tiles1)
        run_head(p1_ref, t1_ref, w1_ref, out1_ref, acc1_rows,
                 valid1, g1, br1, tiles1, need_mask1, rem1)

    return kernel


def _pad_to(n, m):
    return ((n + m - 1) // m) * m


def _wmse_stats_fused(pred0, target0, weights0, pred1, target1, weights1,
                      tile_rows, nonneg_weights):
    """Returns (stats0, stats1) with stats = [sum_sel, pos_cnt(, nz_cnt)]."""
    if tile_rows <= 0 or tile_rows % _SUBLANES != 0:
        raise ValueError(
            f"tile_rows must be a positive multiple of {_SUBLANES}, got {tile_rows}")

    p0, t0, w0 = _to_rows128(pred0), _to_rows128(target0), _to_rows128(weights0)
    p1, t1, w1 = _to_rows128(pred1), _to_rows128(target1), _to_rows128(weights1)

    rows0, rows1 = p0.shape[0], p1.shape[0]
    head0 = _head_geometry(rows0, tile_rows)
    head1 = _head_geometry(rows1, tile_rows)
    br0, tiles0, acc0_rows = head0[0], head0[1], head0[2]
    br1, tiles1, acc1_rows = head1[0], head1[1], head1[2]
    nstats = 2 if nonneg_weights else 3

    # Per-core tile counts (rectangular grid); each core owns a contiguous
    # half of each head's tile range.
    t0c = pl.cdiv(tiles0, _NUM_CORE_SPLITS)
    t1c = pl.cdiv(tiles1, _NUM_CORE_SPLITS)
    steps_per_core = t0c + t1c
    grid = (_NUM_CORE_SPLITS, steps_per_core)

    # Input index maps: advance through the core's own range during that head's
    # phase, otherwise stay clamped (resident block, no re-DMA). The clamps are
    # chosen so that on a single-TC chip the block index never revisits an
    # earlier block -> each input byte is DMA'd exactly once.
    def head0_map(c, i):
        return (jnp.minimum(c * t0c + jnp.minimum(i, t0c - 1), tiles0 - 1), 0)

    def head1_map(c, i):
        return (jnp.minimum(c * t1c + jnp.maximum(i - t0c, 0), tiles1 - 1), 0)

    spec0 = pl.BlockSpec((br0, _LANES), head0_map)
    spec1 = pl.BlockSpec((br1, _LANES), head1_map)

    # The per-core (nstats, acc_rows, 128) partial accumulators are the kernel
    # outputs themselves: their block index is constant along the step axis, so
    # they stay resident in VMEM and are written back once per core.
    out_shape = (
        jax.ShapeDtypeStruct((_NUM_CORE_SPLITS, nstats, acc0_rows, _LANES), jnp.float32),
        jax.ShapeDtypeStruct((_NUM_CORE_SPLITS, nstats, acc1_rows, _LANES), jnp.float32),
    )
    out_specs = (
        pl.BlockSpec((1, nstats, acc0_rows, _LANES), lambda c, i: (c, 0, 0, 0)),
        pl.BlockSpec((1, nstats, acc1_rows, _LANES), lambda c, i: (c, 0, 0, 0)),
    )

    # VMEM budget from the actual footprint: 6 double-buffered input blocks +
    # the small resident output partials + headroom. Default tile_rows keeps
    # this well under half of v7x's 64 MiB physical VMEM.
    in_bytes = 0
    for arr, br in ((p0, br0), (t0, br0), (w0, br0), (p1, br1), (t1, br1), (w1, br1)):
        in_bytes += 2 * _pad_to(br, _SUBLANES) * _LANES * arr.dtype.itemsize
    acc_bytes = 0
    for acc_rows in (acc0_rows, acc1_rows):
        acc_bytes += 2 * nstats * _pad_to(acc_rows, _SUBLANES) * _LANES * 4
    vmem_limit = int(in_bytes + acc_bytes) + (8 << 20)
    vmem_limit = min(max(vmem_limit, 32 << 20), 120 << 20)

    kernel = _make_fused_kernel(head0, head1, t0c, t1c, nstats)

    out0, out1 = pl.pallas_call(
        kernel,
        out_shape=out_shape,
        grid_spec=pltpu.PrefetchScalarGridSpec(
            num_scalar_prefetch=0,
            grid=grid,
            in_specs=[spec0, spec0, spec0, spec1, spec1, spec1],
            out_specs=out_specs,
        ),
        compiler_params=pltpu.CompilerParams(
            dimension_semantics=("parallel", "arbitrary"),
            vmem_limit_bytes=vmem_limit,
        ),
    )(p0, t0, w0, p1, t1, w1)

    # Final tiny reductions (over cores and the (acc_rows,128) partials) happen
    # in plain JAX: a few KiB total.
    stats0 = jnp.sum(out0, axis=(0, 2, 3))
    stats1 = jnp.sum(out1, axis=(0, 2, 3))
    return stats0, stats1


@partial(jax.jit, static_argnames=("tile_rows", "nonneg_weights"))
def weighted_mse_loss(pred_lsd, target_lsd, lsd_weights,
                      pred_sdt, target_sdt, sdt_weights,
                      tile_rows=2048, nonneg_weights=False):
    """WeightedMSELoss forward. Inputs may be f32 or bf16 (bf16 halves HBM reads;
    the kernel accumulates in f32 either way).

    nonneg_weights=True skips the (scale != 0) count (valid when weights >= 0).
    """
    stats0, stats1 = _wmse_stats_fused(pred_lsd, target_lsd, lsd_weights,
                                       pred_sdt, target_sdt, sdt_weights,
                                       tile_rows, nonneg_weights)

    def head_loss(stats):
        sum_sel, pos_cnt = stats[0], stats[1]
        # torch: if any(scale != 0): mean(scale[weights > 0]) else mean(scale).
        # In the else-branch scale is identically zero, so that mean is 0.0.
        masked_mean = sum_sel / pos_cnt       # 0/0 -> NaN matches torch.mean(empty)
        if nonneg_weights:
            nonzero = sum_sel > 0.0           # w >= 0: implied by the nz count
        else:
            nonzero = stats[2] > 0.0
        return jnp.where(nonzero, masked_mean, jnp.float32(0.0))

    return head_loss(stats0) + head_loss(stats1)


# --- pure numpy reference (mirrors the PyTorch module exactly) ---------------
def _ref_calc_mse(pred, target, weights):
    scale = weights * (pred - target) ** 2
    if np.count_nonzero(scale) != 0:
        return np.mean(scale[weights > 0])
    return np.mean(scale)


def _ref_loss(pl_, tl, wl, ps, ts, ws):
    return _ref_calc_mse(pl_, tl, wl) + _ref_calc_mse(ps, ts, ws)


if __name__ == "__main__":
    key = jax.random.PRNGKey(0)

    def make_head(k, shape, zero_weights=False):
        k1, k2, k3 = jax.random.split(k, 3)
        pred = jax.random.normal(k1, shape, dtype=jnp.float32)
        target = jax.random.normal(k2, shape, dtype=jnp.float32)
        u = jax.random.uniform(k3, shape, dtype=jnp.float32)
        w = jnp.zeros(shape, jnp.float32) if zero_weights else jnp.where(u > 0.3, u, 0.0)
        return pred, target, w

    k1, k2, k3, k4 = jax.random.split(key, 4)

    # Test 1: lane-aligned NCHW shapes (zero-copy path, default tiles).
    p_l, t_l, w_l = make_head(k1, (2, 6, 16, 16))
    p_s, t_s, w_s = make_head(k2, (2, 1, 16, 16))
    loss = jax.block_until_ready(weighted_mse_loss(p_l, t_l, w_l, p_s, t_s, w_s))
    ref = _ref_loss(np.asarray(p_l), np.asarray(t_l), np.asarray(w_l),
                    np.asarray(p_s), np.asarray(t_s), np.asarray(w_s))
    np.testing.assert_allclose(np.asarray(loss), ref, rtol=1e-5, atol=1e-6)

    # Test 1b: same inputs, nonneg_weights fast path (2-stat kernel).
    loss_nn = jax.block_until_ready(
        weighted_mse_loss(p_l, t_l, w_l, p_s, t_s, w_s, nonneg_weights=True))
    np.testing.assert_allclose(np.asarray(loss_nn), ref, rtol=1e-5, atol=1e-6)

    # Test 2: non-lane-aligned shapes + tiny tile_rows to exercise the padded /
    # ragged-multi-tile path, plus an all-zero-weight head (else-branch).
    p_l2, t_l2, w_l2 = make_head(k3, (2, 6, 15, 15))
    p_s2, t_s2, w_s2 = make_head(k4, (2, 1, 15, 15), zero_weights=True)
    loss2 = jax.block_until_ready(
        weighted_mse_loss(p_l2, t_l2, w_l2, p_s2, t_s2, w_s2, tile_rows=8))
    ref2 = _ref_loss(np.asarray(p_l2), np.asarray(t_l2), np.asarray(w_l2),
                     np.asarray(p_s2), np.asarray(t_s2), np.asarray(w_s2))
    np.testing.assert_allclose(np.asarray(loss2), ref2, rtol=1e-5, atol=1e-6)

    print("KERNEL_OK")
</pallas_src>

<mosaic_0001>
module attributes {stable_mosaic.version = 11 : i64} {
  func.func @kernel(%arg0: i32, %arg1: i32, %arg2: memref<24x128xf32, #tpu.memory_space<vmem>>, %arg3: memref<24x128xf32, #tpu.memory_space<vmem>>, %arg4: memref<24x128xf32, #tpu.memory_space<vmem>>, %arg5: memref<4x128xf32, #tpu.memory_space<vmem>>, %arg6: memref<4x128xf32, #tpu.memory_space<vmem>>, %arg7: memref<4x128xf32, #tpu.memory_space<vmem>>, %arg8: memref<1x3x8x128xf32, #tpu.memory_space<vmem>>, %arg9: memref<1x3x4x128xf32, #tpu.memory_space<vmem>>) attributes {dimension_semantics = [#tpu.dimension_semantics<parallel>, #tpu.dimension_semantics<arbitrary>], iteration_bounds = array<i64: 2, 2>, scalar_prefetch = 0 : i64, scratch_operands = 0 : i64, tpu.core_type = #tpu.core_type<tc>, window_params = [{transform_indices = @transform_0, window_bounds = array<i64: 24, 128>}, {transform_indices = @transform_1, window_bounds = array<i64: 24, 128>}, {transform_indices = @transform_2, window_bounds = array<i64: 24, 128>}, {transform_indices = @transform_3, window_bounds = array<i64: 4, 128>}, {transform_indices = @transform_4, window_bounds = array<i64: 4, 128>}, {transform_indices = @transform_5, window_bounds = array<i64: 4, 128>}, {transform_indices = @transform_6, window_bounds = array<i64: 1, 3, 8, 128>}, {transform_indices = @transform_7, window_bounds = array<i64: 1, 3, 4, 128>}]} {
    %c0_i32 = arith.constant 0 : i32
    %0 = arith.cmpi eq, %arg1, %c0_i32 : i32
    %1 = arith.extui %0 : i1 to i32
    %c0_i32_0 = arith.constant 0 : i32
    %2 = arith.cmpi ne, %1, %c0_i32_0 : i32
    scf.if %2 {
      %cst = arith.constant 0.000000e+00 : f32
      %18 = vector.broadcast %cst : f32 to vector<1x3x8x128xf32>
      %c0 = arith.constant 0 : index
      %c0_9 = arith.constant 0 : index
      %c0_10 = arith.constant 0 : index
      %c0_11 = arith.constant 0 : index
      %19 = vector.load %arg8[%c0, %c0_9, %c0_10, %c0_11] : memref<1x3x8x128xf32, #tpu.memory_space<vmem>>, vector<1x3x8x128xf32>
      tpu.vector_store %arg8[%c0, %c0_9, %c0_10, %c0_11], %18 {strides = array<i32>} : memref<1x3x8x128xf32, #tpu.memory_space<vmem>>, vector<1x3x8x128xf32>,
      %cst_12 = arith.constant 0.000000e+00 : f32
      %20 = vector.broadcast %cst_12 : f32 to vector<1x3x4x128xf32>
      %c0_13 = arith.constant 0 : index
      %c0_14 = arith.constant 0 : index
      %c0_15 = arith.constant 0 : index
      %c0_16 = arith.constant 0 : index
      %21 = vector.load %arg9[%c0_13, %c0_14, %c0_15, %c0_16] : memref<1x3x4x128xf32, #tpu.memory_space<vmem>>, vector<1x3x4x128xf32>
      tpu.vector_store %arg9[%c0_13, %c0_14, %c0_15, %c0_16], %20 {strides = array<i32>} : memref<1x3x4x128xf32, #tpu.memory_space<vmem>>, vector<1x3x4x128xf32>,
    } else {
    }
    %c1_i32 = arith.constant 1 : i32
    %3 = arith.muli %arg0, %c1_i32 : i32
    %4 = arith.addi %3, %arg1 : i32
    %c1_i32_1 = arith.constant 1 : i32
    %5 = arith.cmpi slt, %arg1, %c1_i32_1 : i32
    %c1_i32_2 = arith.constant 1 : i32
    %6 = arith.cmpi slt, %4, %c1_i32_2 : i32
    %7 = arith.andi %5, %6 : i1
    %8 = arith.extui %7 : i1 to i32
    %c0_i32_3 = arith.constant 0 : i32
    %9 = arith.cmpi ne, %8, %c0_i32_3 : i32
    scf.if %9 {
      %c0 = arith.constant 0 : index
      %c0_9 = arith.constant 0 : index
      %18 = vector.load %arg2[%c0, %c0_9] : memref<24x128xf32, #tpu.memory_space<vmem>>, vector<24x128xf32>
      %c0_10 = arith.constant 0 : index
      %c0_11 = arith.constant 0 : index
      %19 = vector.load %arg3[%c0_10, %c0_11] : memref<24x128xf32, #tpu.memory_space<vmem>>, vector<24x128xf32>
      %c0_12 = arith.constant 0 : index
      %c0_13 = arith.constant 0 : index
      %20 = vector.load %arg4[%c0_12, %c0_13] : memref<24x128xf32, #tpu.memory_space<vmem>>, vector<24x128xf32>
      %21 = arith.subf %18, %19 : vector<24x128xf32>
      %22 = arith.mulf %20, %21 : vector<24x128xf32>
      %23 = arith.mulf %22, %21 : vector<24x128xf32>
      %cst = arith.constant 0.000000e+00 : f32
      %24 = vector.broadcast %cst : f32 to vector<24x128xf32>
      %25 = arith.cmpf ogt, %20, %24 : vector<24x128xf32>
      %cst_14 = arith.constant 0.000000e+00 : f32
      %26 = vector.broadcast %cst_14 : f32 to vector<24x128xf32>
      %27 = arith.select %25, %23, %26 : vector<24x128xi1>, vector<24x128xf32>
      %28 = arith.extui %25 : vector<24x128xi1> to vector<24x128xi32>
      %29 = arith.sitofp %28 : vector<24x128xi32> to vector<24x128xf32>
      %cst_15 = arith.constant 0.000000e+00 : f32
      %30 = vector.broadcast %cst_15 : f32 to vector<24x128xf32>
      %31 = arith.cmpf one, %23, %30 : vector<24x128xf32>
      %32 = arith.extui %31 : vector<24x128xi1> to vector<24x128xi32>
      %33 = arith.sitofp %32 : vector<24x128xi32> to vector<24x128xf32>
      %34 = vector.shape_cast %27 : vector<24x128xf32> to vector<3x8x128xf32>
      %cst_16 = arith.constant dense<0.000000e+00> : vector<8x128xf32>
      %35 = vector.multi_reduction <add>, %34, %cst_16 [0] : vector<3x8x128xf32> to vector<8x128xf32>
      %c0_17 = arith.constant 0 : index
      %c0_18 = arith.constant 0 : index
      %c0_19 = arith.constant 0 : index
      %c0_20 = arith.constant 0 : index
      %36 = vector.load %arg8[%c0_17, %c0_18, %c0_19, %c0_20] : memref<1x3x8x128xf32, #tpu.memory_space<vmem>>, vector<1x1x8x128xf32>
      %37 = vector.shape_cast %36 : vector<1x1x8x128xf32> to vector<8x128xf32>
      %38 = arith.addf %37, %35 : vector<8x128xf32>
      %c0_21 = arith.constant 0 : index
      %c0_22 = arith.constant 0 : index
      %c0_23 = arith.constant 0 : index
      %c0_24 = arith.constant 0 : index
      %39 = vector.load %arg8[%c0_21, %c0_22, %c0_23, %c0_24] : memref<1x3x8x128xf32, #tpu.memory_space<vmem>>, vector<1x1x8x128xf32>
      %40 = vector.shape_cast %39 : vector<1x1x8x128xf32> to vector<8x128xf32>
      %41 = vector.shape_cast %38 : vector<8x128xf32> to vector<1x1x8x128xf32>
      tpu.vector_store %arg8[%c0_21, %c0_22, %c0_23, %c0_24], %41 {strides = array<i32>} : memref<1x3x8x128xf32, #tpu.memory_space<vmem>>, vector<1x1x8x128xf32>,
      %42 = vector.shape_cast %29 : vector<24x128xf32> to vector<3x8x128xf32>
      %cst_25 = arith.constant dense<0.000000e+00> : vector<8x128xf32>
      %43 = vector.multi_reduction <add>, %42, %cst_25 [0] : vector<3x8x128xf32> to vector<8x128xf32>
      %c0_26 = arith.constant 0 : index
      %c1 = arith.constant 1 : index
      %c0_27 = arith.constant 0 : index
      %c0_28 = arith.constant 0 : index
      %44 = vector.load %arg8[%c0_26, %c1, %c0_27, %c0_28] : memref<1x3x8x128xf32, #tpu.memory_space<vmem>>, vector<1x1x8x128xf32>
      %45 = vector.shape_cast %44 : vector<1x1x8x128xf32> to vector<8x128xf32>
      %46 = arith.addf %45, %43 : vector<8x128xf32>
      %c0_29 = arith.constant 0 : index
      %c1_30 = arith.constant 1 : index
      %c0_31 = arith.constant 0 : index
      %c0_32 = arith.constant 0 : index
      %47 = vector.load %arg8[%c0_29, %c1_30, %c0_31, %c0_32] : memref<1x3x8x128xf32, #tpu.memory_space<vmem>>, vector<1x1x8x128xf32>
      %48 = vector.shape_cast %47 : vector<1x1x8x128xf32> to vector<8x128xf32>
      %49 = vector.shape_cast %46 : vector<8x128xf32> to vector<1x1x8x128xf32>
      tpu.vector_store %arg8[%c0_29, %c1_30, %c0_31, %c0_32], %49 {strides = array<i32>} : memref<1x3x8x128xf32, #tpu.memory_space<vmem>>, vector<1x1x8x128xf32>,
      %50 = vector.shape_cast %33 : vector<24x128xf32> to vector<3x8x128xf32>
      %cst_33 = arith.constant dense<0.000000e+00> : vector<8x128xf32>
      %51 = vector.multi_reduction <add>, %50, %cst_33 [0] : vector<3x8x128xf32> to vector<8x128xf32>
      %c0_34 = arith.constant 0 : index
      %c2 = arith.constant 2 : index
      %c0_35 = arith.constant 0 : index
      %c0_36 = arith.constant 0 : index
      %52 = vector.load %arg8[%c0_34, %c2, %c0_35, %c0_36] : memref<1x3x8x128xf32, #tpu.memory_space<vmem>>, vector<1x1x8x128xf32>
      %53 = vector.shape_cast %52 : vector<1x1x8x128xf32> to vector<8x128xf32>
      %54 = arith.addf %53, %51 : vector<8x128xf32>
      %c0_37 = arith.constant 0 : index
      %c2_38 = arith.constant 2 : index
      %c0_39 = arith.constant 0 : index
      %c0_40 = arith.constant 0 : index
      %55 = vector.load %arg8[%c0_37, %c2_38, %c0_39, %c0_40] : memref<1x3x8x128xf32, #tpu.memory_space<vmem>>, vector<1x1x8x128xf32>
      %56 = vector.shape_cast %55 : vector<1x1x8x128xf32> to vector<8x128xf32>
      %57 = vector.shape_cast %54 : vector<8x128xf32> to vector<1x1x8x128xf32>
      tpu.vector_store %arg8[%c0_37, %c2_38, %c0_39, %c0_40], %57 {strides = array<i32>} : memref<1x3x8x128xf32, #tpu.memory_space<vmem>>, vector<1x1x8x128xf32>,
    } else {
    }
    %c1_i32_4 = arith.constant 1 : i32
    %10 = arith.muli %arg0, %c1_i32_4 : i32
    %c1_i32_5 = arith.constant 1 : i32
    %11 = arith.subi %arg1, %c1_i32_5 : i32
    %12 = arith.addi %10, %11 : i32
    %c1_i32_6 = arith.constant 1 : i32
    %13 = arith.cmpi sge, %arg1, %c1_i32_6 : i32
    %c1_i32_7 = arith.constant 1 : i32
    %14 = arith.cmpi slt, %12, %c1_i32_7 : i32
    %15 = arith.andi %13, %14 : i1
    %16 = arith.extui %15 : i1 to i32
    %c0_i32_8 = arith.constant 0 : i32
    %17 = arith.cmpi ne, %16, %c0_i32_8 : i32
    scf.if %17 {
      %c0 = arith.constant 0 : index
      %c0_9 = arith.constant 0 : index
      %18 = vector.load %arg5[%c0, %c0_9] : memref<4x128xf32, #tpu.memory_space<vmem>>, vector<4x128xf32>
      %c0_10 = arith.constant 0 : index
      %c0_11 = arith.constant 0 : index
      %19 = vector.load %arg6[%c0_10, %c0_11] : memref<4x128xf32, #tpu.memory_space<vmem>>, vector<4x128xf32>
      %c0_12 = arith.constant 0 : index
      %c0_13 = arith.constant 0 : index
      %20 = vector.load %arg7[%c0_12, %c0_13] : memref<4x128xf32, #tpu.memory_space<vmem>>, vector<4x128xf32>
      %21 = arith.subf %18, %19 : vector<4x128xf32>
      %22 = arith.mulf %20, %21 : vector<4x128xf32>
      %23 = arith.mulf %22, %21 : vector<4x128xf32>
      %cst = arith.constant 0.000000e+00 : f32
      %24 = vector.broadcast %cst : f32 to vector<4x128xf32>
      %25 = arith.cmpf ogt, %20, %24 : vector<4x128xf32>
      %cst_14 = arith.constant 0.000000e+00 : f32
      %26 = vector.broadcast %cst_14 : f32 to vector<4x128xf32>
      %27 = arith.select %25, %23, %26 : vector<4x128xi1>, vector<4x128xf32>
      %28 = arith.extui %25 : vector<4x128xi1> to vector<4x128xi32>
      %29 = arith.sitofp %28 : vector<4x128xi32> to vector<4x128xf32>
      %cst_15 = arith.constant 0.000000e+00 : f32
      %30 = vector.broadcast %cst_15 : f32 to vector<4x128xf32>
      %31 = arith.cmpf one, %23, %30 : vector<4x128xf32>
      %32 = arith.extui %31 : vector<4x128xi1> to vector<4x128xi32>
      %33 = arith.sitofp %32 : vector<4x128xi32> to vector<4x128xf32>
      %c0_16 = arith.constant 0 : index
      %c0_17 = arith.constant 0 : index
      %c0_18 = arith.constant 0 : index
      %c0_19 = arith.constant 0 : index
      %34 = vector.load %arg9[%c0_16, %c0_17, %c0_18, %c0_19] : memref<1x3x4x128xf32, #tpu.memory_space<vmem>>, vector<1x1x4x128xf32>
      %35 = vector.shape_cast %34 : vector<1x1x4x128xf32> to vector<4x128xf32>
      %36 = arith.addf %35, %27 : vector<4x128xf32>
      %c0_20 = arith.constant 0 : index
      %c0_21 = arith.constant 0 : index
      %c0_22 = arith.constant 0 : index
      %c0_23 = arith.constant 0 : index
      %37 = vector.load %arg9[%c0_20, %c0_21, %c0_22, %c0_23] : memref<1x3x4x128xf32, #tpu.memory_space<vmem>>, vector<1x1x4x128xf32>
      %38 = vector.shape_cast %37 : vector<1x1x4x128xf32> to vector<4x128xf32>
      %39 = vector.shape_cast %36 : vector<4x128xf32> to vector<1x1x4x128xf32>
      tpu.vector_store %arg9[%c0_20, %c0_21, %c0_22, %c0_23], %39 {strides = array<i32>} : memref<1x3x4x128xf32, #tpu.memory_space<vmem>>, vector<1x1x4x128xf32>,
      %c0_24 = arith.constant 0 : index
      %c1 = arith.constant 1 : index
      %c0_25 = arith.constant 0 : index
      %c0_26 = arith.constant 0 : index
      %40 = vector.load %arg9[%c0_24, %c1, %c0_25, %c0_26] : memref<1x3x4x128xf32, #tpu.memory_space<vmem>>, vector<1x1x4x128xf32>
      %41 = vector.shape_cast %40 : vector<1x1x4x128xf32> to vector<4x128xf32>
      %42 = arith.addf %41, %29 : vector<4x128xf32>
      %c0_27 = arith.constant 0 : index
      %c1_28 = arith.constant 1 : index
      %c0_29 = arith.constant 0 : index
      %c0_30 = arith.constant 0 : index
      %43 = vector.load %arg9[%c0_27, %c1_28, %c0_29, %c0_30] : memref<1x3x4x128xf32, #tpu.memory_space<vmem>>, vector<1x1x4x128xf32>
      %44 = vector.shape_cast %43 : vector<1x1x4x128xf32> to vector<4x128xf32>
      %45 = vector.shape_cast %42 : vector<4x128xf32> to vector<1x1x4x128xf32>
      tpu.vector_store %arg9[%c0_27, %c1_28, %c0_29, %c0_30], %45 {strides = array<i32>} : memref<1x3x4x128xf32, #tpu.memory_space<vmem>>, vector<1x1x4x128xf32>,
      %c0_31 = arith.constant 0 : index
      %c2 = arith.constant 2 : index
      %c0_32 = arith.constant 0 : index
      %c0_33 = arith.constant 0 : index
      %46 = vector.load %arg9[%c0_31, %c2, %c0_32, %c0_33] : memref<1x3x4x128xf32, #tpu.memory_space<vmem>>, vector<1x1x4x128xf32>
      %47 = vector.shape_cast %46 : vector<1x1x4x128xf32> to vector<4x128xf32>
      %48 = arith.addf %47, %33 : vector<4x128xf32>
      %c0_34 = arith.constant 0 : index
      %c2_35 = arith.constant 2 : index
      %c0_36 = arith.constant 0 : index
      %c0_37 = arith.constant 0 : index
      %49 = vector.load %arg9[%c0_34, %c2_35, %c0_36, %c0_37] : memref<1x3x4x128xf32, #tpu.memory_space<vmem>>, vector<1x1x4x128xf32>
      %50 = vector.shape_cast %49 : vector<1x1x4x128xf32> to vector<4x128xf32>
      %51 = vector.shape_cast %48 : vector<4x128xf32> to vector<1x1x4x128xf32>
      tpu.vector_store %arg9[%c0_34, %c2_35, %c0_36, %c0_37], %51 {strides = array<i32>} : memref<1x3x4x128xf32, #tpu.memory_space<vmem>>, vector<1x1x4x128xf32>,
    } else {
    }
    return
  }
  func.func @transform_0(%arg0: i32, %arg1: i32) -> (i32, i32) {
    %c1_i32 = arith.constant 1 : i32
    %0 = arith.muli %arg0, %c1_i32 : i32
    %c0_i32 = arith.constant 0 : i32
    %1 = arith.minsi %arg1, %c0_i32 : i32
    %2 = arith.addi %0, %1 : i32
    %c0_i32_0 = arith.constant 0 : i32
    %3 = arith.minsi %2, %c0_i32_0 : i32
    %c0_i32_1 = arith.constant 0 : i32
    %c0_i32_2 = arith.constant 0 : i32
    return %3, %c0_i32_1 : i32, i32
  }
  func.func @transform_1(%arg0: i32, %arg1: i32) -> (i32, i32) {
    %c1_i32 = arith.constant 1 : i32
    %0 = arith.muli %arg0, %c1_i32 : i32
    %c0_i32 = arith.constant 0 : i32
    %1 = arith.minsi %arg1, %c0_i32 : i32
    %2 = arith.addi %0, %1 : i32
    %c0_i32_0 = arith.constant 0 : i32
    %3 = arith.minsi %2, %c0_i32_0 : i32
    %c0_i32_1 = arith.constant 0 : i32
    %c0_i32_2 = arith.constant 0 : i32
    return %3, %c0_i32_1 : i32, i32
  }
  func.func @transform_2(%arg0: i32, %arg1: i32) -> (i32, i32) {
    %c1_i32 = arith.constant 1 : i32
    %0 = arith.muli %arg0, %c1_i32 : i32
    %c0_i32 = arith.constant 0 : i32
    %1 = arith.minsi %arg1, %c0_i32 : i32
    %2 = arith.addi %0, %1 : i32
    %c0_i32_0 = arith.constant 0 : i32
    %3 = arith.minsi %2, %c0_i32_0 : i32
    %c0_i32_1 = arith.constant 0 : i32
    %c0_i32_2 = arith.constant 0 : i32
    return %3, %c0_i32_1 : i32, i32
  }
  func.func @transform_3(%arg0: i32, %arg1: i32) -> (i32, i32) {
    %c1_i32 = arith.constant 1 : i32
    %0 = arith.muli %arg0, %c1_i32 : i32
    %c1_i32_0 = arith.constant 1 : i32
    %1 = arith.subi %arg1, %c1_i32_0 : i32
    %c0_i32 = arith.constant 0 : i32
    %2 = arith.maxsi %1, %c0_i32 : i32
    %3 = arith.addi %0, %2 : i32
    %c0_i32_1 = arith.constant 0 : i32
    %4 = arith.minsi %3, %c0_i32_1 : i32
    %c0_i32_2 = arith.constant 0 : i32
    %c0_i32_3 = arith.constant 0 : i32
    return %4, %c0_i32_2 : i32, i32
  }
  func.func @transform_4(%arg0: i32, %arg1: i32) -> (i32, i32) {
    %c1_i32 = arith.constant 1 : i32
    %0 = arith.muli %arg0, %c1_i32 : i32
    %c1_i32_0 = arith.constant 1 : i32
    %1 = arith.subi %arg1, %c1_i32_0 : i32
    %c0_i32 = arith.constant 0 : i32
    %2 = arith.maxsi %1, %c0_i32 : i32
    %3 = arith.addi %0, %2 : i32
    %c0_i32_1 = arith.constant 0 : i32
    %4 = arith.minsi %3, %c0_i32_1 : i32
    %c0_i32_2 = arith.constant 0 : i32
    %c0_i32_3 = arith.constant 0 : i32
    return %4, %c0_i32_2 : i32, i32
  }
  func.func @transform_5(%arg0: i32, %arg1: i32) -> (i32, i32) {
    %c1_i32 = arith.constant 1 : i32
    %0 = arith.muli %arg0, %c1_i32 : i32
    %c1_i32_0 = arith.constant 1 : i32
    %1 = arith.subi %arg1, %c1_i32_0 : i32
    %c0_i32 = arith.constant 0 : i32
    %2 = arith.maxsi %1, %c0_i32 : i32
    %3 = arith.addi %0, %2 : i32
    %c0_i32_1 = arith.constant 0 : i32
    %4 = arith.minsi %3, %c0_i32_1 : i32
    %c0_i32_2 = arith.constant 0 : i32
    %c0_i32_3 = arith.constant 0 : i32
    return %4, %c0_i32_2 : i32, i32
  }
  func.func @transform_6(%arg0: i32, %arg1: i32) -> (i32, i32, i32, i32) {
    %c0_i32 = arith.constant 0 : i32
    %c0_i32_0 = arith.constant 0 : i32
    %c0_i32_1 = arith.constant 0 : i32
    %c0_i32_2 = arith.constant 0 : i32
    return %arg0, %c0_i32, %c0_i32_0, %c0_i32_1 : i32, i32, i32, i32
  }
  func.func @transform_7(%arg0: i32, %arg1: i32) -> (i32, i32, i32, i32) {
    %c0_i32 = arith.constant 0 : i32
    %c0_i32_0 = arith.constant 0 : i32
    %c0_i32_1 = arith.constant 0 : i32
    %c0_i32_2 = arith.constant 0 : i32
    return %arg0, %c0_i32, %c0_i32_0, %c0_i32_1 : i32, i32, i32, i32
  }
}

</mosaic_0001>

<llo_original>
// kernel: weighted_mse_loss.1
$region0: #{weighted_mse_loss.1}
  #allocation0 [shape = 'u32[]', space=smem, size = 0x4, offset = 0x4, fixed_abs, tag = 'smem constant byte address 0x4 - core index']
  #allocation1 [shape = 'u32[144,128]{1,0:T(1,128)}', space=vmem, size = 0x12000, scoped, tag = 'internal scratch']
  %s0 = inlined_call_operand.vmem [shape: f32[24,128], index: 0, kind: input, shape index: {}]
  %s1 = inlined_call_operand.vmem [shape: f32[24,128], index: 1, kind: input, shape index: {}]
  %s2 = inlined_call_operand.vmem [shape: f32[24,128], index: 2, kind: input, shape index: {}]
  %s3 = inlined_call_operand.vmem [shape: f32[4,128], index: 3, kind: input, shape index: {}]
  %s4 = inlined_call_operand.vmem [shape: f32[4,128], index: 4, kind: input, shape index: {}]
  %s5 = inlined_call_operand.vmem [shape: f32[4,128], index: 5, kind: input, shape index: {}]
  %s6 = inlined_call_operand.vmem [shape: f32[2,3,8,128], index: 6, kind: output, shape index: {0}]
  %s7 = inlined_call_operand.vmem [shape: f32[2,3,4,128], index: 7, kind: output, shape index: {1}]
  %8 = xla_tuple %s6, %s7
  %s9 = sld [smem:[#allocation0]]
  $region77: #{weighted_mse_loss.1} parent=0
    _
  %s11 = ssub.s32 1, %s9
  %s12 = scalar_select 0, %s11, %s9
  loop: start=0, step=1, limit=6
  $region2: #{weighted_mse_loss.1} parent=0 // loop_pre_header
    _
  $region3: #{weighted_mse_loss.1} parent=0 // loop_header
    %s14 = sphi 0, %s18
    %p15 = scmp.ge.s32.totalorder %s14, 6
    %s21 = sphi 0, %s33
    %s22 = sphi 0, %s29
    %s23 = sphi 0, %s21
    %s24 = sphi 0, %s22
    %s25 = sphi 0, %s23
    %s26 = sphi 0, %s24
    %s46 = sphi 0, %s48
    %s49 = sphi 0, %s46
    %s50 = sphi 0, %s49
    %s66 = sphi 0, %s50
    %s82 = sphi 0, %s84
    %s85 = sphi 0, %s82
    %s86 = sphi 0, %s85
    %s102 = sphi 0, %s86
    %s118 = sphi 0, %s120
    %s121 = sphi 0, %s118
    %s122 = sphi 0, %s121
    %s138 = sphi 0, %s122
    %s156 = sphi 0, %s158
    %s159 = sphi 0, %s156
    %s160 = sphi 0, %s159
    %s176 = sphi 0, %s160
    %s194 = sphi 0, %s196
    %s197 = sphi 0, %s194
    %s198 = sphi 0, %s197
    %s214 = sphi 0, %s198
    %s232 = sphi 0, %s234
    %s235 = sphi 0, %s232
    %s236 = sphi 0, %s235
    %s252 = sphi 0, %s236
    %s258 = sphi 0, %s260
    %s261 = sphi 0, %s258
    %s262 = sphi 0, %s261
    %s278 = sphi 0, %s262
    %s284 = sphi 0, %s286
    %s287 = sphi 0, %s284
    %s288 = sphi 0, %s287
    %s304 = sphi 0, %s288
  $region4: #{weighted_mse_loss.1} parent=0 // loop_header_branch
    %17 = sbr.rel (%p15) target = $region8
  $region5: #{weighted_mse_loss.1} parent=0 // loop_body
    %s19 = ssub.s32 %s14, 1
    %s20 = ssub.s32 %s14, 2
    %s27 = sadd.s32 1, %s22
    %p28 = scmp.ge.s32.totalorder %s27, 2
    %s29 = scalar_select %p28, 0, %s27
    %s30 = sadd.s32 1, %s21
    %s31 = scalar_select %p28, %s30, %s21
    %p32 = scmp.ge.s32.totalorder %s31, 2
    %s33 = scalar_select %p32, 0, %s31
    %p34 = scmp.lt.s32.totalorder %s22, 0
    %s35 = scalar_select %p34, %s22, 0
    %s36 = sadd.s32 %s21, %s35
    %p37 = scmp.lt.s32.totalorder %s36, 0
    %s38 = scalar_select %p37, %s36, 0
    %p39 = scmp.lt.s32.totalorder %s29, 0
    %s40 = scalar_select %p39, %s29, 0
    %s41 = sadd.s32 %s33, %s40
    %p42 = scmp.lt.s32.totalorder %s41, 0
    %s43 = scalar_select %p42, %s41, 0
    %s44 = ssub.s32 %s38, %s43
    %p45 = scmp.eq.s32.totalorder %s44, 0
    %s47 = sadd.s32 %s46, 1
    %s48 = scalar_select %p45, %s46, %s47
    %p51 = pneg %p45
    %p52 = scmp.eq.s32.totalorder %s14, 3
    %p53 = por %p51, %p52
    %p54 = scmp.ne.s32.totalorder %s46, %s49
    %p55 = scmp.eq.s32.totalorder %s14, 0
    %p56 = por %p54, %p55
    %p57 = scmp.ne.s32.totalorder %s46, %s49
    %p58 = scmp.eq.s32.totalorder %s19, 3
    %p59 = por %p57, %p58
    %p60 = scmp.ne.s32.totalorder %s49, %s50
    %p61 = scmp.eq.s32.totalorder %s19, 0
    %p62 = por %p60, %p61
    %p63 = scmp.ne.s32.totalorder %s49, %s50
    %p64 = scmp.eq.s32.totalorder %s20, 3
    %p65 = por %p63, %p64
    %p67 = scmp.ne.s32.totalorder %s50, %s66
    %p68 = scmp.eq.s32.totalorder %s20, 0
    %p69 = por %p67, %p68
    %p70 = scmp.lt.s32.totalorder %s22, 0
    %s71 = scalar_select %p70, %s22, 0
    %s72 = sadd.s32 %s21, %s71
    %p73 = scmp.lt.s32.totalorder %s72, 0
    %s74 = scalar_select %p73, %s72, 0
    %p75 = scmp.lt.s32.totalorder %s29, 0
    %s76 = scalar_select %p75, %s29, 0
    %s77 = sadd.s32 %s33, %s76
    %p78 = scmp.lt.s32.totalorder %s77, 0
    %s79 = scalar_select %p78, %s77, 0
    %s80 = ssub.s32 %s74, %s79
    %p81 = scmp.eq.s32.totalorder %s80, 0
    %s83 = sadd.s32 %s82, 1
    %s84 = scalar_select %p81, %s82, %s83
    %p87 = pneg %p81
    %p88 = scmp.eq.s32.totalorder %s14, 3
    %p89 = por %p87, %p88
    %p90 = scmp.ne.s32.totalorder %s82, %s85
    %p91 = scmp.eq.s32.totalorder %s14, 0
    %p92 = por %p90, %p91
    %p93 = scmp.ne.s32.totalorder %s82, %s85
    %p94 = scmp.eq.s32.totalorder %s19, 3
    %p95 = por %p93, %p94
    %p96 = scmp.ne.s32.totalorder %s85, %s86
    %p97 = scmp.eq.s32.totalorder %s19, 0
    %p98 = por %p96, %p97
    %p99 = scmp.ne.s32.totalorder %s85, %s86
    %p100 = scmp.eq.s32.totalorder %s20, 3
    %p101 = por %p99, %p100
    %p103 = scmp.ne.s32.totalorder %s86, %s102
    %p104 = scmp.eq.s32.totalorder %s20, 0
    %p105 = por %p103, %p104
    %p106 = scmp.lt.s32.totalorder %s22, 0
    %s107 = scalar_select %p106, %s22, 0
    %s108 = sadd.s32 %s21, %s107
    %p109 = scmp.lt.s32.totalorder %s108, 0
    %s110 = scalar_select %p109, %s108, 0
    %p111 = scmp.lt.s32.totalorder %s29, 0
    %s112 = scalar_select %p111, %s29, 0
    %s113 = sadd.s32 %s33, %s112
    %p114 = scmp.lt.s32.totalorder %s113, 0
    %s115 = scalar_select %p114, %s113, 0
    %s116 = ssub.s32 %s110, %s115
    %p117 = scmp.eq.s32.totalorder %s116, 0
    %s119 = sadd.s32 %s118, 1
    %s120 = scalar_select %p117, %s118, %s119
    %p123 = pneg %p117
    %p124 = scmp.eq.s32.totalorder %s14, 3
    %p125 = por %p123, %p124
    %p126 = scmp.ne.s32.totalorder %s118, %s121
    %p127 = scmp.eq.s32.totalorder %s14, 0
    %p128 = por %p126, %p127
    %p129 = scmp.ne.s32.totalorder %s118, %s121
    %p130 = scmp.eq.s32.totalorder %s19, 3
    %p131 = por %p129, %p130
    %p132 = scmp.ne.s32.totalorder %s121, %s122
    %p133 = scmp.eq.s32.totalorder %s19, 0
    %p134 = por %p132, %p133
    %p135 = scmp.ne.s32.totalorder %s121, %s122
    %p136 = scmp.eq.s32.totalorder %s20, 3
    %p137 = por %p135, %p136
    %p139 = scmp.ne.s32.totalorder %s122, %s138
    %p140 = scmp.eq.s32.totalorder %s20, 0
    %p141 = por %p139, %p140
    %s142 = ssub.s32 %s22, 1
    %p143 = scmp.gt.s32.totalorder %s142, 0
    %s144 = scalar_select %p143, %s142, 0
    %s145 = sadd.s32 %s21, %s144
    %p146 = scmp.lt.s32.totalorder %s145, 0
    %s147 = scalar_select %p146, %s145, 0
    %s148 = ssub.s32 %s29, 1
    %p149 = scmp.gt.s32.totalorder %s148, 0
    %s150 = scalar_select %p149, %s148, 0
    %s151 = sadd.s32 %s33, %s150
    %p152 = scmp.lt.s32.totalorder %s151, 0
    %s153 = scalar_select %p152, %s151, 0
    %s154 = ssub.s32 %s147, %s153
    %p155 = scmp.eq.s32.totalorder %s154, 0
    %s157 = sadd.s32 %s156, 1
    %s158 = scalar_select %p155, %s156, %s157
    %p161 = pneg %p155
    %p162 = scmp.eq.s32.totalorder %s14, 3
    %p163 = por %p161, %p162
    %p164 = scmp.ne.s32.totalorder %s156, %s159
    %p165 = scmp.eq.s32.totalorder %s14, 0
    %p166 = por %p164, %p165
    %p167 = scmp.ne.s32.totalorder %s156, %s159
    %p168 = scmp.eq.s32.totalorder %s19, 3
    %p169 = por %p167, %p168
    %p170 = scmp.ne.s32.totalorder %s159, %s160
    %p171 = scmp.eq.s32.totalorder %s19, 0
    %p172 = por %p170, %p171
    %p173 = scmp.ne.s32.totalorder %s159, %s160
    %p174 = scmp.eq.s32.totalorder %s20, 3
    %p175 = por %p173, %p174
    %p177 = scmp.ne.s32.totalorder %s160, %s176
    %p178 = scmp.eq.s32.totalorder %s20, 0
    %p179 = por %p177, %p178
    %s180 = ssub.s32 %s22, 1
    %p181 = scmp.gt.s32.totalorder %s180, 0
    %s182 = scalar_select %p181, %s180, 0
    %s183 = sadd.s32 %s21, %s182
    %p184 = scmp.lt.s32.totalorder %s183, 0
    %s185 = scalar_select %p184, %s183, 0
    %s186 = ssub.s32 %s29, 1
    %p187 = scmp.gt.s32.totalorder %s186, 0
    %s188 = scalar_select %p187, %s186, 0
    %s189 = sadd.s32 %s33, %s188
    %p190 = scmp.lt.s32.totalorder %s189, 0
    %s191 = scalar_select %p190, %s189, 0
    %s192 = ssub.s32 %s185, %s191
    %p193 = scmp.eq.s32.totalorder %s192, 0
    %s195 = sadd.s32 %s194, 1
    %s196 = scalar_select %p193, %s194, %s195
    %p199 = pneg %p193
    %p200 = scmp.eq.s32.totalorder %s14, 3
    %p201 = por %p199, %p200
    %p202 = scmp.ne.s32.totalorder %s194, %s197
    %p203 = scmp.eq.s32.totalorder %s14, 0
    %p204 = por %p202, %p203
    %p205 = scmp.ne.s32.totalorder %s194, %s197
    %p206 = scmp.eq.s32.totalorder %s19, 3
    %p207 = por %p205, %p206
    %p208 = scmp.ne.s32.totalorder %s197, %s198
    %p209 = scmp.eq.s32.totalorder %s19, 0
    %p210 = por %p208, %p209
    %p211 = scmp.ne.s32.totalorder %s197, %s198
    %p212 = scmp.eq.s32.totalorder %s20, 3
    %p213 = por %p211, %p212
    %p215 = scmp.ne.s32.totalorder %s198, %s214
    %p216 = scmp.eq.s32.totalorder %s20, 0
    %p217 = por %p215, %p216
    %s218 = ssub.s32 %s22, 1
    %p219 = scmp.gt.s32.totalorder %s218, 0
    %s220 = scalar_select %p219, %s218, 0
    %s221 = sadd.s32 %s21, %s220
    %p222 = scmp.lt.s32.totalorder %s221, 0
    %s223 = scalar_select %p222, %s221, 0
    %s224 = ssub.s32 %s29, 1
    %p225 = scmp.gt.s32.totalorder %s224, 0
    %s226 = scalar_select %p225, %s224, 0
    %s227 = sadd.s32 %s33, %s226
    %p228 = scmp.lt.s32.totalorder %s227, 0
    %s229 = scalar_select %p228, %s227, 0
    %s230 = ssub.s32 %s223, %s229
    %p231 = scmp.eq.s32.totalorder %s230, 0
    %s233 = sadd.s32 %s232, 1
    %s234 = scalar_select %p231, %s232, %s233
    %p237 = pneg %p231
    %p238 = scmp.eq.s32.totalorder %s14, 3
    %p239 = por %p237, %p238
    %p240 = scmp.ne.s32.totalorder %s232, %s235
    %p241 = scmp.eq.s32.totalorder %s14, 0
    %p242 = por %p240, %p241
    %p243 = scmp.ne.s32.totalorder %s232, %s235
    %p244 = scmp.eq.s32.totalorder %s19, 3
    %p245 = por %p243, %p244
    %p246 = scmp.ne.s32.totalorder %s235, %s236
    %p247 = scmp.eq.s32.totalorder %s19, 0
    %p248 = por %p246, %p247
    %p249 = scmp.ne.s32.totalorder %s235, %s236
    %p250 = scmp.eq.s32.totalorder %s20, 3
    %p251 = por %p249, %p250
    %p253 = scmp.ne.s32.totalorder %s236, %s252
    %p254 = scmp.eq.s32.totalorder %s20, 0
    %p255 = por %p253, %p254
    %s256 = ssub.s32 %s21, %s33
    %p257 = scmp.eq.s32.totalorder %s256, 0
    %s259 = sadd.s32 %s258, 1
    %s260 = scalar_select %p257, %s258, %s259
    %p263 = pneg %p257
    %p264 = scmp.eq.s32.totalorder %s14, 3
    %p265 = por %p263, %p264
    %p266 = scmp.ne.s32.totalorder %s258, %s261
    %p267 = scmp.eq.s32.totalorder %s14, 0
    %p268 = por %p266, %p267
    %p269 = scmp.ne.s32.totalorder %s258, %s261
    %p270 = scmp.eq.s32.totalorder %s19, 3
    %p271 = por %p269, %p270
    %p272 = scmp.ne.s32.totalorder %s261, %s262
    %p273 = scmp.eq.s32.totalorder %s19, 0
    %p274 = por %p272, %p273
    %p275 = scmp.ne.s32.totalorder %s261, %s262
    %p276 = scmp.eq.s32.totalorder %s20, 3
    %p277 = por %p275, %p276
    %p279 = scmp.ne.s32.totalorder %s262, %s278
    %p280 = scmp.eq.s32.totalorder %s20, 0
    %p281 = por %p279, %p280
    %s282 = ssub.s32 %s21, %s33
    %p283 = scmp.eq.s32.totalorder %s282, 0
    %s285 = sadd.s32 %s284, 1
    %s286 = scalar_select %p283, %s284, %s285
    %p289 = pneg %p283
    %p290 = scmp.eq.s32.totalorder %s14, 3
    %p291 = por %p289, %p290
    %p292 = scmp.ne.s32.totalorder %s284, %s287
    %p293 = scmp.eq.s32.totalorder %s14, 0
    %p294 = por %p292, %p293
    %p295 = scmp.ne.s32.totalorder %s284, %s287
    %p296 = scmp.eq.s32.totalorder %s19, 3
    %p297 = por %p295, %p296
    %p298 = scmp.ne.s32.totalorder %s287, %s288
    %p299 = scmp.eq.s32.totalorder %s19, 0
    %p300 = por %p298, %p299
    %p301 = scmp.ne.s32.totalorder %s287, %s288
    %p302 = scmp.eq.s32.totalorder %s20, 3
    %p303 = por %p301, %p302
    %p305 = scmp.ne.s32.totalorder %s288, %s304
    %p306 = scmp.eq.s32.totalorder %s20, 0
    %p307 = por %p305, %p306
    %p308 = scmp.le.s32.totalorder 1, %s14
    %p309 = scmp.lt.s32.totalorder %s14, 5
    %p310 = pnand %p308, %p309
    %p311 = pneg %p310
    // Predicated region
    $region9: #{weighted_mse_loss.1} parent=5 // pred_check
      _
    $region10: #{weighted_mse_loss.1} parent=5 // pred_check_branch
      %313 = sbr.rel (%p310) target = $region12
    $region11: #{weighted_mse_loss.1} parent=5 // pred_region
      %s314 = ssub.s32 %s14, 1
    $region12: #{weighted_mse_loss.1} parent=5 // pred_fallthru
      _
    %p315 = scmp.lt.s32.totalorder %s14, 4
    // Predicated region
    $region13: #{weighted_mse_loss.1} parent=5 // pred_check
      %p316 = pneg %p315
    $region14: #{weighted_mse_loss.1} parent=5 // pred_check_branch
      %318 = sbr.rel (%p316) target = $region16
    $region15: #{weighted_mse_loss.1} parent=5 // pred_region
      // Predicated region
      $region17: #{weighted_mse_loss.1} parent=15 // pred_check
        %p319 = pneg %p56
      $region18: #{weighted_mse_loss.1} parent=15 // pred_check_branch
        %321 = sbr.rel (%p319) target = $region20
      $region19: #{weighted_mse_loss.1} parent=15 // pred_region
        %p322 = scmp.lt.s32.totalorder %s22, 0
        %s323 = scalar_select %p322, %s22, 0
        %s324 = sadd.s32 %s21, %s323
        %p325 = scmp.lt.s32.totalorder %s324, 0
        %s326 = scalar_select %p325, %s324, 0
        %s327 = smul.u32 3, %s326
        %p328 = scmp.lt.s32.totalorder %s327, 2
        %s329 = scalar_select %p328, %s327, 2
        %s330 = smul.addr %s329, 8
        %s331 = scalar_lea.vmem %s0, %s330
        %p332 = scmp.lt.s32.totalorder %s22, 0
        %s333 = scalar_select %p332, %s22, 0
        %s334 = sadd.s32 %s21, %s333
        %p335 = scmp.lt.s32.totalorder %s334, 0
        %s336 = scalar_select %p335, %s334, 0
        %s337 = smul.u32 3, %s336
      $region20: #{weighted_mse_loss.1} parent=15 // pred_fallthru
        _
      // Predicated region
      $region21: #{weighted_mse_loss.1} parent=15 // pred_check
        %p338 = pneg %p92
      $region22: #{weighted_mse_loss.1} parent=15 // pred_check_branch
        %340 = sbr.rel (%p338) target = $region24
      $region23: #{weighted_mse_loss.1} parent=15 // pred_region
        %p341 = scmp.lt.s32.totalorder %s22, 0
        %s342 = scalar_select %p341, %s22, 0
        %s343 = sadd.s32 %s21, %s342
        %p344 = scmp.lt.s32.totalorder %s343, 0
        %s345 = scalar_select %p344, %s343, 0
        %s346 = smul.u32 3, %s345
        %p347 = scmp.lt.s32.totalorder %s346, 2
        %s348 = scalar_select %p347, %s346, 2
        %s349 = smul.addr %s348, 8
        %s350 = scalar_lea.vmem %s1, %s349
        %p351 = scmp.lt.s32.totalorder %s22, 0
        %s352 = scalar_select %p351, %s22, 0
        %s353 = sadd.s32 %s21, %s352
        %p354 = scmp.lt.s32.totalorder %s353, 0
        %s355 = scalar_select %p354, %s353, 0
        %s356 = smul.u32 3, %s355
      $region24: #{weighted_mse_loss.1} parent=15 // pred_fallthru
        _
      // Predicated region
      $region25: #{weighted_mse_loss.1} parent=15 // pred_check
        %p357 = pneg %p128
      $region26: #{weighted_mse_loss.1} parent=15 // pred_check_branch
        %359 = sbr.rel (%p357) target = $region28
      $region27: #{weighted_mse_loss.1} parent=15 // pred_region
        %p360 = scmp.lt.s32.totalorder %s22, 0
        %s361 = scalar_select %p360, %s22, 0
        %s362 = sadd.s32 %s21, %s361
        %p363 = scmp.lt.s32.totalorder %s362, 0
        %s364 = scalar_select %p363, %s362, 0
        %s365 = smul.u32 3, %s364
        %p366 = scmp.lt.s32.totalorder %s365, 2
        %s367 = scalar_select %p366, %s365, 2
        %s368 = smul.addr %s367, 8
        %s369 = scalar_lea.vmem %s2, %s368
        %p370 = scmp.lt.s32.totalorder %s22, 0
        %s371 = scalar_select %p370, %s22, 0
        %s372 = sadd.s32 %s21, %s371
        %p373 = scmp.lt.s32.totalorder %s372, 0
        %s374 = scalar_select %p373, %s372, 0
        %s375 = smul.u32 3, %s374
      $region28: #{weighted_mse_loss.1} parent=15 // pred_fallthru
        _
      // Predicated region
      $region29: #{weighted_mse_loss.1} parent=15 // pred_check
        %p376 = pneg %p166
      $region30: #{weighted_mse_loss.1} parent=15 // pred_check_branch
        %378 = sbr.rel (%p376) target = $region32
      $region31: #{weighted_mse_loss.1} parent=15 // pred_region
        %s379 = ssub.s32 %s22, 1
        %p380 = scmp.gt.s32.totalorder %s379, 0
        %s381 = scalar_select %p380, %s379, 0
        %s382 = sadd.s32 %s21, %s381
        %p383 = scmp.lt.s32.totalorder %s382, 0
        %s384 = scalar_select %p383, %s382, 0
        %p385 = scmp.lt.s32.totalorder %s384, 0
        %s386 = scalar_select %p385, %s384, 0
        %s387 = smul.addr %s386, 4
        %s388 = scalar_lea.vmem %s3, %s387
        %s389 = ssub.s32 %s22, 1
        %p390 = scmp.gt.s32.totalorder %s389, 0
        %s391 = scalar_select %p390, %s389, 0
        %s392 = sadd.s32 %s21, %s391
        %p393 = scmp.lt.s32.totalorder %s392, 0
        %s394 = scalar_select %p393, %s392, 0
      $region32: #{weighted_mse_loss.1} parent=15 // pred_fallthru
        _
      // Predicated region
      $region33: #{weighted_mse_loss.1} parent=15 // pred_check
        %p395 = pneg %p204
      $region34: #{weighted_mse_loss.1} parent=15 // pred_check_branch
        %397 = sbr.rel (%p395) target = $region36
      $region35: #{weighted_mse_loss.1} parent=15 // pred_region
        %s398 = ssub.s32 %s22, 1
        %p399 = scmp.gt.s32.totalorder %s398, 0
        %s400 = scalar_select %p399, %s398, 0
        %s401 = sadd.s32 %s21, %s400
        %p402 = scmp.lt.s32.totalorder %s401, 0
        %s403 = scalar_select %p402, %s401, 0
        %p404 = scmp.lt.s32.totalorder %s403, 0
        %s405 = scalar_select %p404, %s403, 0
        %s406 = smul.addr %s405, 4
        %s407 = scalar_lea.vmem %s4, %s406
        %s408 = ssub.s32 %s22, 1
        %p409 = scmp.gt.s32.totalorder %s408, 0
        %s410 = scalar_select %p409, %s408, 0
        %s411 = sadd.s32 %s21, %s410
        %p412 = scmp.lt.s32.totalorder %s411, 0
        %s413 = scalar_select %p412, %s411, 0
      $region36: #{weighted_mse_loss.1} parent=15 // pred_fallthru
        _
      // Predicated region
      $region37: #{weighted_mse_loss.1} parent=15 // pred_check
        %p414 = pneg %p242
      $region38: #{weighted_mse_loss.1} parent=15 // pred_check_branch
        %416 = sbr.rel (%p414) target = $region40
      $region39: #{weighted_mse_loss.1} parent=15 // pred_region
        %s417 = ssub.s32 %s22, 1
        %p418 = scmp.gt.s32.totalorder %s417, 0
        %s419 = scalar_select %p418, %s417, 0
        %s420 = sadd.s32 %s21, %s419
        %p421 = scmp.lt.s32.totalorder %s420, 0
        %s422 = scalar_select %p421, %s420, 0
        %p423 = scmp.lt.s32.totalorder %s422, 0
        %s424 = scalar_select %p423, %s422, 0
        %s425 = smul.addr %s424, 4
        %s426 = scalar_lea.vmem %s5, %s425
        %s427 = ssub.s32 %s22, 1
        %p428 = scmp.gt.s32.totalorder %s427, 0
        %s429 = scalar_select %p428, %s427, 0
        %s430 = sadd.s32 %s21, %s429
        %p431 = scmp.lt.s32.totalorder %s430, 0
        %s432 = scalar_select %p431, %s430, 0
      $region40: #{weighted_mse_loss.1} parent=15 // pred_fallthru
        _
    $region16: #{weighted_mse_loss.1} parent=5 // pred_fallthru
      _
    %p433 = scmp.le.s32.totalorder 1, %s14
    %p434 = scmp.lt.s32.totalorder %s14, 5
    %p435 = pnand %p433, %p434
    %p436 = pneg %p435
    // Predicated region
    $region41: #{weighted_mse_loss.1} parent=5 // pred_check
      _
    $region42: #{weighted_mse_loss.1} parent=5 // pred_check_branch
      %438 = sbr.rel (%p435) target = $region44
    $region43: #{weighted_mse_loss.1} parent=5 // pred_region
      %s439 = ssub.s32 %s14, 1
      %p440 = scmp.lt.s32.totalorder %s24, 0
      %s441 = scalar_select %p440, %s24, 0
      %s442 = sadd.s32 %s23, %s441
      %p443 = scmp.lt.s32.totalorder %s442, 0
      %s444 = scalar_select %p443, %s442, 0
      %s445 = smul.u32 3, %s444
      %p446 = scmp.lt.s32.totalorder %s445, 2
      %s447 = scalar_select %p446, %s445, 2
      %s448 = smul.addr %s447, 8
      %s449 = scalar_lea.vmem %s0, %s448
      %p450 = pneg %p62
      %p451 = pneg %p59
      %p452 = scmp.lt.s32.totalorder %s24, 0
      %s453 = scalar_select %p452, %s24, 0
      %s454 = sadd.s32 %s23, %s453
      %p455 = scmp.lt.s32.totalorder %s454, 0
      %s456 = scalar_select %p455, %s454, 0
      %s457 = smul.u32 3, %s456
      %p458 = scmp.lt.s32.totalorder %s457, 2
      %s459 = scalar_select %p458, %s457, 2
      %s460 = smul.addr %s459, 8
      %s461 = scalar_lea.vmem %s1, %s460
      %p462 = pneg %p98
      %p463 = pneg %p95
      %p464 = scmp.lt.s32.totalorder %s24, 0
      %s465 = scalar_select %p464, %s24, 0
      %s466 = sadd.s32 %s23, %s465
      %p467 = scmp.lt.s32.totalorder %s466, 0
      %s468 = scalar_select %p467, %s466, 0
      %s469 = smul.u32 3, %s468
      %p470 = scmp.lt.s32.totalorder %s469, 2
      %s471 = scalar_select %p470, %s469, 2
      %s472 = smul.addr %s471, 8
      %s473 = scalar_lea.vmem %s2, %s472
      %p474 = pneg %p134
      %p475 = pneg %p131
      %s476 = ssub.s32 %s24, 1
      %p477 = scmp.gt.s32.totalorder %s476, 0
      %s478 = scalar_select %p477, %s476, 0
      %s479 = sadd.s32 %s23, %s478
      %p480 = scmp.lt.s32.totalorder %s479, 0
      %s481 = scalar_select %p480, %s479, 0
      %p482 = scmp.lt.s32.totalorder %s481, 0
      %s483 = scalar_select %p482, %s481, 0
      %s484 = smul.addr %s483, 4
      %s485 = scalar_lea.vmem %s3, %s484
      %p486 = pneg %p172
      %p487 = pneg %p169
      %s488 = ssub.s32 %s24, 1
      %p489 = scmp.gt.s32.totalorder %s488, 0
      %s490 = scalar_select %p489, %s488, 0
      %s491 = sadd.s32 %s23, %s490
      %p492 = scmp.lt.s32.totalorder %s491, 0
      %s493 = scalar_select %p492, %s491, 0
      %p494 = scmp.lt.s32.totalorder %s493, 0
      %s495 = scalar_select %p494, %s493, 0
      %s496 = smul.addr %s495, 4
      %s497 = scalar_lea.vmem %s4, %s496
      %p498 = pneg %p210
      %p499 = pneg %p207
      %s500 = ssub.s32 %s24, 1
      %p501 = scmp.gt.s32.totalorder %s500, 0
      %s502 = scalar_select %p501, %s500, 0
      %s503 = sadd.s32 %s23, %s502
      %p504 = scmp.lt.s32.totalorder %s503, 0
      %s505 = scalar_select %p504, %s503, 0
      %p506 = scmp.lt.s32.totalorder %s505, 0
      %s507 = scalar_select %p506, %s505, 0
      %s508 = smul.addr %s507, 4
      %s509 = scalar_lea.vmem %s5, %s508
      %p510 = pneg %p248
      %p511 = pneg %p245
      %p512 = pneg %p274
      %p513 = pneg %p271
      %p514 = scmp.lt.s32.totalorder %s23, 1
      %s515 = scalar_select %p514, %s23, 1
      %s516 = smul.addr %s515, 3
      %s517 = smul.addr %s516, 8
      %s518 = scalar_lea.vmem %s6, %s517
      %p519 = pneg %p300
      %p520 = pneg %p297
      %p521 = scmp.lt.s32.totalorder %s23, 1
      %s522 = scalar_select %p521, %s23, 1
      %s523 = smul.addr %s522, 3
      %s524 = smul.addr %s523, 4
      %s525 = scalar_lea.vmem %s7, %s524
      %p526 = scmp.lt.s32.totalorder %s24, 0
      %s527 = scalar_select %p526, %s24, 0
      %s528 = sadd.s32 %s23, %s527
      %p529 = scmp.lt.s32.totalorder %s528, 0
      %s530 = scalar_select %p529, %s528, 0
      %s531 = smul.u32 3, %s530
      %p532 = scmp.lt.s32.totalorder %s531, 2
      %s533 = scalar_select %p532, %s531, 2
      %s534 = smul.addr %s533, 8
      %s535 = scalar_lea.vmem %s0, %s534
      %p536 = scmp.lt.s32.totalorder %s24, 0
      %s537 = scalar_select %p536, %s24, 0
      %s538 = sadd.s32 %s23, %s537
      %p539 = scmp.lt.s32.totalorder %s538, 0
      %s540 = scalar_select %p539, %s538, 0
      %s541 = smul.u32 3, %s540
      %p542 = scmp.lt.s32.totalorder %s24, 0
      %s543 = scalar_select %p542, %s24, 0
      %s544 = sadd.s32 %s23, %s543
      %p545 = scmp.lt.s32.totalorder %s544, 0
      %s546 = scalar_select %p545, %s544, 0
      %s547 = smul.u32 3, %s546
      %p548 = scmp.lt.s32.totalorder %s547, 2
      %s549 = scalar_select %p548, %s547, 2
      %s550 = smul.addr %s549, 8
      %s551 = scalar_lea.vmem %s1, %s550
      %p552 = scmp.lt.s32.totalorder %s24, 0
      %s553 = scalar_select %p552, %s24, 0
      %s554 = sadd.s32 %s23, %s553
      %p555 = scmp.lt.s32.totalorder %s554, 0
      %s556 = scalar_select %p555, %s554, 0
      %s557 = smul.u32 3, %s556
      %p558 = scmp.lt.s32.totalorder %s24, 0
      %s559 = scalar_select %p558, %s24, 0
      %s560 = sadd.s32 %s23, %s559
      %p561 = scmp.lt.s32.totalorder %s560, 0
      %s562 = scalar_select %p561, %s560, 0
      %s563 = smul.u32 3, %s562
      %p564 = scmp.lt.s32.totalorder %s563, 2
      %s565 = scalar_select %p564, %s563, 2
      %s566 = smul.addr %s565, 8
      %s567 = scalar_lea.vmem %s2, %s566
      %p568 = scmp.lt.s32.totalorder %s24, 0
      %s569 = scalar_select %p568, %s24, 0
      %s570 = sadd.s32 %s23, %s569
      %p571 = scmp.lt.s32.totalorder %s570, 0
      %s572 = scalar_select %p571, %s570, 0
      %s573 = smul.u32 3, %s572
      %s574 = ssub.s32 %s24, 1
      %p575 = scmp.gt.s32.totalorder %s574, 0
      %s576 = scalar_select %p575, %s574, 0
      %s577 = sadd.s32 %s23, %s576
      %p578 = scmp.lt.s32.totalorder %s577, 0
      %s579 = scalar_select %p578, %s577, 0
      %p580 = scmp.lt.s32.totalorder %s579, 0
      %s581 = scalar_select %p580, %s579, 0
      %s582 = smul.addr %s581, 4
      %s583 = scalar_lea.vmem %s3, %s582
      %s584 = ssub.s32 %s24, 1
      %p585 = scmp.gt.s32.totalorder %s584, 0
      %s586 = scalar_select %p585, %s584, 0
      %s587 = sadd.s32 %s23, %s586
      %p588 = scmp.lt.s32.totalorder %s587, 0
      %s589 = scalar_select %p588, %s587, 0
      %s590 = ssub.s32 %s24, 1
      %p591 = scmp.gt.s32.totalorder %s590, 0
      %s592 = scalar_select %p591, %s590, 0
      %s593 = sadd.s32 %s23, %s592
      %p594 = scmp.lt.s32.totalorder %s593, 0
      %s595 = scalar_select %p594, %s593, 0
      %p596 = scmp.lt.s32.totalorder %s595, 0
      %s597 = scalar_select %p596, %s595, 0
      %s598 = smul.addr %s597, 4
      %s599 = scalar_lea.vmem %s4, %s598
      %s600 = ssub.s32 %s24, 1
      %p601 = scmp.gt.s32.totalorder %s600, 0
      %s602 = scalar_select %p601, %s600, 0
      %s603 = sadd.s32 %s23, %s602
      %p604 = scmp.lt.s32.totalorder %s603, 0
      %s605 = scalar_select %p604, %s603, 0
      %s606 = ssub.s32 %s24, 1
      %p607 = scmp.gt.s32.totalorder %s606, 0
      %s608 = scalar_select %p607, %s606, 0
      %s609 = sadd.s32 %s23, %s608
      %p610 = scmp.lt.s32.totalorder %s609, 0
      %s611 = scalar_select %p610, %s609, 0
      %p612 = scmp.lt.s32.totalorder %s611, 0
      %s613 = scalar_select %p612, %s611, 0
      %s614 = smul.addr %s613, 4
      %s615 = scalar_lea.vmem %s5, %s614
      %s616 = ssub.s32 %s24, 1
      %p617 = scmp.gt.s32.totalorder %s616, 0
      %s618 = scalar_select %p617, %s616, 0
      %s619 = sadd.s32 %s23, %s618
      %p620 = scmp.lt.s32.totalorder %s619, 0
      %s621 = scalar_select %p620, %s619, 0
      %p622 = scmp.lt.s32.totalorder %s23, 1
      %s623 = scalar_select %p622, %s23, 1
      %s624 = smul.addr %s623, 3
      %s625 = smul.addr %s624, 8
      %s626 = scalar_lea.vmem %s6, %s625
      %p627 = scmp.lt.s32.totalorder %s23, 1
      %s628 = scalar_select %p627, %s23, 1
      %s629 = smul.addr %s628, 3
      %s630 = smul.addr %s629, 4
      %s631 = scalar_lea.vmem %s7, %s630
      %p632 = scmp.eq.s32.totalorder %s24, 0
      // Predicated region
      $region45: #{weighted_mse_loss.1} parent=43 // pred_check
        %p633 = pneg %p632
      $region46: #{weighted_mse_loss.1} parent=43 // pred_check_branch
        %635 = sbr.rel (%p633) target = $region48
      $region47: #{weighted_mse_loss.1} parent=43 // pred_region
        %636 = vst [vmem:[%s626] sm:$0xff] 0.0
        %637 = vst [vmem:[%s626 + $0x8] sm:$0xff] 0.0
        %638 = vst [vmem:[%s626 + $0x10] sm:$0xff] 0.0
        %639 = vst [vmem:[%s631] sm:$0xf] 0.0
        %640 = vst [vmem:[%s631 + $0x4] sm:$0xf] 0.0
        %641 = vst [vmem:[%s631 + $0x8] sm:$0xf] 0.0
      $region48: #{weighted_mse_loss.1} parent=43 // pred_fallthru
        _
      %s642 = sadd.s32 %s23, %s24
      %p643 = scmp.lt.s32.totalorder %s24, 1
      %p644 = scmp.lt.s32.totalorder %s642, 1
      %p645 = pnand %p643, %p644
      %p646 = pneg %p645
      // Predicated region
      $region49: #{weighted_mse_loss.1} parent=43 // pred_check
        _
      $region50: #{weighted_mse_loss.1} parent=43 // pred_check_branch
        %648 = sbr.rel (%p645) target = $region52
      $region51: #{weighted_mse_loss.1} parent=43 // pred_region
        %v649 = vld [vmem:[%s535] sm:$0xff]
        %v650 = vld [vmem:[%s535 + $0x8] sm:$0xff]
        %v651 = vld [vmem:[%s535 + $0x10] sm:$0xff]
        %v652 = vld [vmem:[%s551] sm:$0xff]
        %v653 = vld [vmem:[%s551 + $0x8] sm:$0xff]
        %v654 = vld [vmem:[%s551 + $0x10] sm:$0xff]
        %v655 = vld [vmem:[%s567] sm:$0xff]
        %v656 = vld [vmem:[%s567 + $0x8] sm:$0xff]
        %v657 = vld [vmem:[%s567 + $0x10] sm:$0xff]
        %v658 = vsub.f32 %v649, %v652
        %v659 = vsub.f32 %v650, %v653
        %v660 = vsub.f32 %v651, %v654
        %v661 = vmul.f32 %v655, %v658
        %v662 = vmul.f32 %v656, %v659
        %v663 = vmul.f32 %v657, %v660
        %v664 = vmul.f32 %v661, %v658
        %v665 = vmul.f32 %v662, %v659
        %v666 = vmul.f32 %v663, %v660
        %vm667 = vcmp.gt.f32.partialorder %v655, 0.0
        %vm668 = vcmp.gt.f32.partialorder %v656, 0.0
        %vm669 = vcmp.gt.f32.partialorder %v657, 0.0
        %v670 = vsel %vm667, %v664, 0.0
        %v671 = vsel %vm668, %v665, 0.0
        %v672 = vsel %vm669, %v666, 0.0
        %v673 = vsel %vm667, 1, 0
        %v674 = vsel %vm668, 1, 0
        %v675 = vsel %vm669, 1, 0
        %v676 = vcvt.s32.f32 %v673
        %v677 = vcvt.s32.f32 %v674
        %v678 = vcvt.s32.f32 %v675
        %vm679 = vcmp.ne.f32.partialorder %v664, 0.0
        %vm680 = vcmp.ne.f32.partialorder %v665, 0.0
        %vm681 = vcmp.ne.f32.partialorder %v666, 0.0
        %v682 = vsel %vm679, 1, 0
        %v683 = vsel %vm680, 1, 0
        %v684 = vsel %vm681, 1, 0
        %v685 = vcvt.s32.f32 %v682
        %v686 = vcvt.s32.f32 %v683
        %v687 = vcvt.s32.f32 %v684
        %v688 = vadd.f32 %v670, %v671
        %v689 = vadd.f32 %v688, %v672
        %v690 = vld [vmem:[%s626] sm:$0xff]
        %v691 = vadd.f32 %v690, %v689
        %692 = vst [vmem:[%s626] sm:$0xff] %v691
        %v693 = vadd.f32 %v676, %v677
        %v694 = vadd.f32 %v693, %v678
        %s695 = scalar_lea.vmem %s626, 8
        %v696 = vld [vmem:[%s695] sm:$0xff]
        %v697 = vadd.f32 %v696, %v694
        %698 = vst [vmem:[%s695] sm:$0xff] %v697
        %v699 = vadd.f32 %v685, %v686
        %v700 = vadd.f32 %v699, %v687
        %s701 = scalar_lea.vmem %s626, 16
        %v702 = vld [vmem:[%s701] sm:$0xff]
        %v703 = vadd.f32 %v702, %v700
        %704 = vst [vmem:[%s701] sm:$0xff] %v703
      $region52: #{weighted_mse_loss.1} parent=43 // pred_fallthru
        _
      %s705 = ssub.s32 %s24, 1
      %s706 = sadd.s32 %s23, %s705
      %p707 = scmp.ge.s32.totalorder %s24, 1
      %p708 = scmp.lt.s32.totalorder %s706, 1
      %p709 = pnand %p707, %p708
      %p710 = pneg %p709
      // Predicated region
      $region53: #{weighted_mse_loss.1} parent=43 // pred_check
        _
      $region54: #{weighted_mse_loss.1} parent=43 // pred_check_branch
        %712 = sbr.rel (%p709) target = $region56
      $region55: #{weighted_mse_loss.1} parent=43 // pred_region
        %v713 = vld [vmem:[%s583] sm:$0xf]
        %v714 = vld [vmem:[%s599] sm:$0xf]
        %v715 = vld [vmem:[%s615] sm:$0xf]
        %v716 = vsub.f32 %v713, %v714
        %v717 = vmul.f32 %v715, %v716
        %v718 = vmul.f32 %v717, %v716
        %vm719 = vcmp.gt.f32.partialorder %v715, 0.0
        %v720 = vsel %vm719, %v718, 0.0
        %v721 = vsel %vm719, 1, 0
        %v722 = vcvt.s32.f32 %v721
        %vm723 = vcmp.ne.f32.partialorder %v718, 0.0
        %v724 = vsel %vm723, 1, 0
        %v725 = vcvt.s32.f32 %v724
        %v726 = vld [vmem:[%s631] sm:$0xf]
        %v727 = vadd.f32 %v726, %v720
        %728 = vst [vmem:[%s631] sm:$0xf] %v727
        %s729 = scalar_lea.vmem %s631, 4
        %v730 = vld [vmem:[%s729] sm:$0xf]
        %v731 = vadd.f32 %v730, %v722
        %732 = vst [vmem:[%s729] sm:$0xf] %v731
        %s733 = scalar_lea.vmem %s631, 8
        %v734 = vld [vmem:[%s733] sm:$0xf]
        %v735 = vadd.f32 %v734, %v725
        %736 = vst [vmem:[%s733] sm:$0xf] %v735
      $region56: #{weighted_mse_loss.1} parent=43 // pred_fallthru
        _
      %p737 = scmp.lt.s32.totalorder %s23, 1
      %s738 = scalar_select %p737, %s23, 1
      %s739 = smul.addr %s738, 3
      %s740 = smul.addr %s739, 8
      %s741 = scalar_lea.vmem %s6, %s740
      %p742 = scmp.lt.s32.totalorder %s23, 1
      %s743 = scalar_select %p742, %s23, 1
      %s744 = smul.addr %s743, 3
      %s745 = smul.addr %s744, 4
      %s746 = scalar_lea.vmem %s7, %s745
      // Predicated region
      $region57: #{weighted_mse_loss.1} parent=43 // pred_check
        %p747 = pneg %p271
      $region58: #{weighted_mse_loss.1} parent=43 // pred_check_branch
        %749 = sbr.rel (%p747) target = $region60
      $region59: #{weighted_mse_loss.1} parent=43 // pred_region
        _
      $region60: #{weighted_mse_loss.1} parent=43 // pred_fallthru
        _
      // Predicated region
      $region61: #{weighted_mse_loss.1} parent=43 // pred_check
        %p750 = pneg %p297
      $region62: #{weighted_mse_loss.1} parent=43 // pred_check_branch
        %752 = sbr.rel (%p750) target = $region64
      $region63: #{weighted_mse_loss.1} parent=43 // pred_region
        _
      $region64: #{weighted_mse_loss.1} parent=43 // pred_fallthru
        _
    $region44: #{weighted_mse_loss.1} parent=5 // pred_fallthru
      _
    %p753 = scmp.le.s32.totalorder 2, %s14
    // Predicated region
    $region65: #{weighted_mse_loss.1} parent=5 // pred_check
      %p754 = pneg %p753
    $region66: #{weighted_mse_loss.1} parent=5 // pred_check_branch
      %756 = sbr.rel (%p754) target = $region68
    $region67: #{weighted_mse_loss.1} parent=5 // pred_region
      %s757 = ssub.s32 %s14, 2
      // Predicated region
      $region69: #{weighted_mse_loss.1} parent=67 // pred_check
        %p758 = pneg %p277
      $region70: #{weighted_mse_loss.1} parent=67 // pred_check_branch
        %760 = sbr.rel (%p758) target = $region72
      $region71: #{weighted_mse_loss.1} parent=67 // pred_region
        %p761 = scmp.lt.s32.totalorder %s25, 1
        %s762 = scalar_select %p761, %s25, 1
        %s763 = smul.addr %s762, 3
        %s764 = smul.addr %s763, 8
        %s765 = scalar_lea.vmem %s6, %s764
      $region72: #{weighted_mse_loss.1} parent=67 // pred_fallthru
        _
      // Predicated region
      $region73: #{weighted_mse_loss.1} parent=67 // pred_check
        %p766 = pneg %p303
      $region74: #{weighted_mse_loss.1} parent=67 // pred_check_branch
        %768 = sbr.rel (%p766) target = $region76
      $region75: #{weighted_mse_loss.1} parent=67 // pred_region
        %p769 = scmp.lt.s32.totalorder %s25, 1
        %s770 = scalar_select %p769, %s25, 1
        %s771 = smul.addr %s770, 3
        %s772 = smul.addr %s771, 4
        %s773 = scalar_lea.vmem %s7, %s772
      $region76: #{weighted_mse_loss.1} parent=67 // pred_fallthru
        _
    $region68: #{weighted_mse_loss.1} parent=5 // pred_fallthru
      _
  $region6: #{weighted_mse_loss.1} parent=0 // loop_footer
    %s18 = sadd.s32 1, %s14
  $region7: #{weighted_mse_loss.1} parent=0 // loop_footer_branch
    %13 = sbr.rel target = $region3
  $region8: #{weighted_mse_loss.1} parent=0 // loop_exit
    _

</llo_original>
